<compile_context>
chip_gen: v5e
topology: v5e:2x2
jax: 0.10.0
libtpu: 0.0.40
codegen_flags: <defaults>
</compile_context>

<pallas_src>
import functools

import jax
import jax.numpy as jnp
from jax.experimental import pallas as pl
from jax.experimental.pallas import tpu as pltpu

LANE = 128          # TPU vreg lane width (last dim)
BATCH_ALIGN = 16    # sublane alignment; 16 keeps bf16 activation tiles packed


def _round_up(x, m):
    return -(-x // m) * m


# ----------------------------------------------------------------------------
# Kernel: one (MC sample k, Dout tile j, batch tile i) grid step per call.
# Batch axis i is innermost; the sampled weight is cached in VMEM scratch.
# ----------------------------------------------------------------------------
def _mfvi_layer_kernel(x_ref, wm_ref, ws_ref, bm_ref, bs_ref, epsw_ref, epsb_ref,
                       o_ref, w_sc, b_sc, *, apply_relu, mxu_dtype):
    # Build the sampled weight/bias only when entering a new (k, j) group.
    # Since i is the innermost grid axis, the reparameterization + bf16 cast
    # happen once per weight tile instead of once per batch tile, and the
    # wm/ws/eps blocks (i-invariant index maps) are not re-DMA'd across i.
    @pl.when(pl.program_id(2) == 0)
    def _():
        w_sc[...] = (wm_ref[...] + ws_ref[...] * epsw_ref[0]).astype(w_sc.dtype)
        b_sc[...] = bm_ref[...] + bs_ref[...] * epsb_ref[0]

    # Layer 0 passes a 2-D x block (no K broadcast); deeper layers a (1, tN, D)
    # block.  Rank is static at trace time.
    x = x_ref[...] if len(x_ref.shape) == 2 else x_ref[0]
    y = jnp.dot(x.astype(mxu_dtype), w_sc[...],
                preferred_element_type=jnp.float32) + b_sc[...]
    if apply_relu:
        y = jnp.maximum(y, 0.0)
    o_ref[0] = y.astype(o_ref.dtype)


# ----------------------------------------------------------------------------
# One variational layer (Pallas wrapper).
# ----------------------------------------------------------------------------
def _mfvi_layer(x, wm, ws, bm, bs, eps_w, eps_b, *, tN, tJ, apply_relu,
                mxu_dtype, out_dtype):
    """x: (n_pad, din_pad) for layer 0 or (K, n_pad, din_pad) for deeper layers.
    wm/ws: (din_pad, dout_pad); bm/bs: (1, dout_pad);
    eps_w: (K, din_pad, dout_pad); eps_b: (K, 1, dout_pad).
    Returns (K, n_pad, dout_pad) in out_dtype."""
    K = eps_w.shape[0]
    if x.ndim == 2:
        n_pad, din_pad = x.shape
        x_spec = pl.BlockSpec((tN, din_pad), lambda k, j, i: (i, 0))
    else:
        _, n_pad, din_pad = x.shape
        x_spec = pl.BlockSpec((1, tN, din_pad), lambda k, j, i: (k, i, 0))
    dout_pad = wm.shape[1]
    grid = (K, dout_pad // tJ, n_pad // tN)

    kernel = functools.partial(_mfvi_layer_kernel,
                               apply_relu=apply_relu, mxu_dtype=mxu_dtype)
    return pl.pallas_call(
        kernel,
        out_shape=jax.ShapeDtypeStruct((K, n_pad, dout_pad), out_dtype),
        grid=grid,
        in_specs=[
            x_spec,
            pl.BlockSpec((din_pad, tJ), lambda k, j, i: (0, j)),
            pl.BlockSpec((din_pad, tJ), lambda k, j, i: (0, j)),
            pl.BlockSpec((1, tJ), lambda k, j, i: (0, j)),
            pl.BlockSpec((1, tJ), lambda k, j, i: (0, j)),
            pl.BlockSpec((1, din_pad, tJ), lambda k, j, i: (k, 0, j)),
            pl.BlockSpec((1, 1, tJ), lambda k, j, i: (k, 0, j)),
        ],
        out_specs=pl.BlockSpec((1, tN, tJ), lambda k, j, i: (k, i, j)),
        scratch_shapes=[pltpu.VMEM((din_pad, tJ), mxu_dtype),   # sampled W (bf16)
                        pltpu.VMEM((1, tJ), jnp.float32)],      # sampled b (f32)
        compiler_params=pltpu.CompilerParams(
            # K / Dout tiles independent (megacore shards K on v7x);
            # batch axis carries the cached weight scratch -> "arbitrary".
            dimension_semantics=("parallel", "parallel", "arbitrary"),
            vmem_limit_bytes=48 * 1024 * 1024),
    )(x, wm, ws, bm, bs, eps_w, eps_b)


# ----------------------------------------------------------------------------
# MFVI_NN parameters + forward (glue in plain JAX, hot path in Pallas).
# ----------------------------------------------------------------------------
def init_mfvi_params(key, input_size, hidden_size, output_size, num_tasks=1):
    """Synthetic init mirroring MFVI_NN.__init__ shapes:
    W_m ~ 0.1*N(0,1), W_v = -6.0, b_m ~ 0.1*N(0,1), b_v = 0.5*(-6.0) = -3.0,
    plus per-task output heads with the same scheme."""
    sizes = [input_size] + list(hidden_size) + [output_size]
    params = {"hW_m": [], "hW_v": [], "hb_m": [], "hb_v": [],
              "oW_m": [], "oW_v": [], "ob_m": [], "ob_v": []}
    for i in range(len(hidden_size)):
        din, dout = sizes[i], sizes[i + 1]
        key, k1, k2 = jax.random.split(key, 3)
        params["hW_m"].append(0.1 * jax.random.normal(k1, (din, dout), jnp.float32))
        params["hW_v"].append(jnp.full((din, dout), -6.0, jnp.float32))
        params["hb_m"].append(0.1 * jax.random.normal(k2, (dout,), jnp.float32))
        params["hb_v"].append(jnp.full((dout,), -3.0, jnp.float32))
    din, dout = sizes[-2], sizes[-1]
    for _ in range(num_tasks):
        key, k1, k2 = jax.random.split(key, 3)
        params["oW_m"].append(0.1 * jax.random.normal(k1, (din, dout), jnp.float32))
        params["oW_v"].append(jnp.full((din, dout), -6.0, jnp.float32))
        params["ob_m"].append(0.1 * jax.random.normal(k2, (dout,), jnp.float32))
        params["ob_v"].append(jnp.full((dout,), -3.0, jnp.float32))
    return params


def _collect_layers(params, task_idx):
    layers = list(zip(params["hW_m"], params["hW_v"],
                      params["hb_m"], params["hb_v"]))
    layers.append((params["oW_m"][task_idx], params["oW_v"][task_idx],
                   params["ob_m"][task_idx], params["ob_v"][task_idx]))
    return layers


def sample_eps(params, task_idx, num_samples, key):
    """Reparameterization noise for every layer (one (K,Din,Dout) + (K,1,Dout))."""
    eps_ws, eps_bs = [], []
    for (w_m, _, b_m, _) in _collect_layers(params, task_idx):
        key, kw, kb = jax.random.split(key, 3)
        eps_ws.append(jax.random.normal(kw, (num_samples,) + w_m.shape, jnp.float32))
        eps_bs.append(jax.random.normal(kb, (num_samples, 1) + b_m.shape, jnp.float32))
    return eps_ws, eps_bs


def mfvi_forward(params, inputs, task_idx, num_samples, key=None, *, eps=None,
                 mxu_dtype=jnp.bfloat16, act_dtype=jnp.bfloat16,
                 block_n=256, block_dout=256):
    """Pallas equivalent of MFVI_NN.forward(inputs, task_idx, num_samples).

    If `eps` is None, reparameterization noise is drawn from `key` with
    jax.random; otherwise the supplied (eps_ws, eps_bs) lists are used.
    Returns logits of shape (num_samples, batch, output_size), float32.
    """
    N, d_in = inputs.shape
    K = num_samples
    layers = _collect_layers(params, task_idx)
    n_layers = len(layers)

    if eps is None:
        if key is None:
            raise ValueError("need a PRNG key when eps is not supplied")
        eps = sample_eps(params, task_idx, K, key)
    eps_ws, eps_bs = eps

    # Batch (sublane) tiling / padding.
    tN = min(block_n, _round_up(N, BATCH_ALIGN))
    n_pad = _round_up(N, tN)
    din_pad = _round_up(d_in, LANE)

    # Layer-0 input: 2-D, lane-padded, NOT broadcast over K (the layer-0 x
    # BlockSpec ignores k, so the same input block serves every MC sample).
    x = jnp.zeros((n_pad, din_pad), act_dtype).at[:N, :d_in].set(
        inputs.astype(act_dtype))

    # TODO(synk): for repeated forwards (training loop) the per-layer padding
    # + exp(0.5*log_var) below can be hoisted and done once per optimizer step.
    for li, (w_m, w_v, b_m, b_v) in enumerate(layers):
        din, dout = w_m.shape
        tJ = min(block_dout, _round_up(dout, LANE))
        dout_pad = _round_up(dout, tJ)
        last = li == n_layers - 1

        # sigma computed ONCE per layer here (no exp inside the kernel, not
        # once per MC sample).  Zero padding of mean and sigma makes padded
        # rows/cols of the sampled weight exactly 0.
        w_sigma = jnp.exp(0.5 * w_v)
        b_sigma = jnp.exp(0.5 * b_v)
        wm_p = jnp.zeros((din_pad, dout_pad), jnp.float32).at[:din, :dout].set(w_m)
        ws_p = jnp.zeros((din_pad, dout_pad), jnp.float32).at[:din, :dout].set(w_sigma)
        bm_p = jnp.zeros((1, dout_pad), jnp.float32).at[0, :dout].set(b_m)
        bs_p = jnp.zeros((1, dout_pad), jnp.float32).at[0, :dout].set(b_sigma)
        ew_p = jnp.zeros((K, din_pad, dout_pad), jnp.float32
                         ).at[:, :din, :dout].set(eps_ws[li])
        eb_p = jnp.zeros((K, 1, dout_pad), jnp.float32
                         ).at[:, :, :dout].set(eps_bs[li])

        x = _mfvi_layer(x, wm_p, ws_p, bm_p, bs_p, ew_p, eb_p,
                        tN=tN, tJ=tJ, apply_relu=not last, mxu_dtype=mxu_dtype,
                        out_dtype=jnp.float32 if last else act_dtype)
        din_pad = dout_pad

    out_size = layers[-1][0].shape[1]
    return x[:, :N, :out_size]
    # TODO(synk): _KL / cross-entropy training cost are host/XLA-side scalar
    # glue (KL of diagonal Gaussians + Adam loop); not part of the forward
    # hot path and not implemented as Pallas kernels.


# ----------------------------------------------------------------------------
# Pure-JAX reference of the same sampled computation (same eps), for checking.
# ----------------------------------------------------------------------------
def mfvi_forward_ref(params, inputs, task_idx, eps, *, mxu_dtype=None):
    eps_ws, eps_bs = eps
    K = eps_ws[0].shape[0]
    x = jnp.broadcast_to(inputs.astype(jnp.float32)[None], (K,) + inputs.shape)
    layers = _collect_layers(params, task_idx)
    for li, (w_m, w_v, b_m, b_v) in enumerate(layers):
        W = w_m[None] + jnp.exp(0.5 * w_v)[None] * eps_ws[li]
        b = b_m[None, None] + jnp.exp(0.5 * b_v)[None, None] * eps_bs[li]
        if mxu_dtype is not None:
            lhs, rhs = x.astype(mxu_dtype), W.astype(mxu_dtype)
        else:
            lhs, rhs = x, W
        x = jnp.einsum("mni,mio->mno", lhs, rhs,
                       preferred_element_type=jnp.float32) + b
        if li < len(layers) - 1:
            x = jnp.maximum(x, 0.0)
    return x


if __name__ == "__main__":
    input_size, hidden_size, output_size = 16, [32, 32], 8
    batch_unique, num_samples, task_idx = 16, 4, 0

    root = jax.random.PRNGKey(0)
    k_params, k_data, k_eps = jax.random.split(root, 3)

    params = init_mfvi_params(k_params, input_size, hidden_size, output_size,
                              num_tasks=1)
    x_unique = jax.random.normal(k_data, (batch_unique, input_size), jnp.float32)
    # Duplicate the batch so we can verify that one MC sample uses the SAME
    # sampled weights for every batch row, even across different batch tiles
    # (block_n=16 forces two tiles -> the VMEM weight cache is exercised).
    x_in = jnp.concatenate([x_unique, x_unique], axis=0)          # (32, 16)
    N = x_in.shape[0]

    eps = sample_eps(params, task_idx, num_samples, k_eps)

    out = jax.block_until_ready(
        mfvi_forward(params, x_in, task_idx, num_samples, eps=eps, block_n=16))
    assert out.shape == (num_samples, N, output_size)
    assert bool(jnp.all(jnp.isfinite(out)))

    # --- Check 1: kernel vs pure-JAX reference with identical eps. ----------
    ref_bf16 = mfvi_forward_ref(params, x_in, task_idx, eps,
                                mxu_dtype=jnp.bfloat16)
    ref_f32 = mfvi_forward_ref(params, x_in, task_idx, eps, mxu_dtype=None)
    assert jnp.allclose(out, ref_bf16, atol=2e-2, rtol=2e-2), \
        "kernel mismatch vs bf16 reference"
    assert jnp.allclose(out, ref_f32, atol=5e-2, rtol=5e-2), \
        "kernel mismatch vs f32 reference"

    # --- Check 2: sampled weights are shared across batch tiles. ------------
    assert jnp.allclose(out[:, :batch_unique], out[:, batch_unique:],
                        atol=1e-6, rtol=0.0), \
        "per-sample weights differ across batch tiles"
    # Different MC samples must see different weight draws.
    assert float(jnp.max(jnp.abs(out[0] - out[1]))) > 1e-4, \
        "MC samples unexpectedly identical (noise not applied)"

    # --- Check 3: zero-noise path equals the deterministic mean network. ----
    zeros_eps = ([jnp.zeros_like(e) for e in eps[0]],
                 [jnp.zeros_like(e) for e in eps[1]])
    out_det = jax.block_until_ready(
        mfvi_forward(params, x_in, task_idx, num_samples, eps=zeros_eps,
                     block_n=16))
    ref_det = mfvi_forward_ref(params, x_in, task_idx, zeros_eps,
                               mxu_dtype=jnp.bfloat16)
    assert jnp.allclose(out_det, ref_det, atol=2e-2, rtol=2e-2), \
        "zero-noise path mismatch vs mean network"

    print("KERNEL_OK")
</pallas_src>

<mosaic_0001>
module attributes {stable_mosaic.version = 11 : i64} {
  func.func @_mfvi_layer_kernel(%arg0: i32, %arg1: i32, %arg2: i32, %arg3: memref<16x128xbf16, #tpu.memory_space<vmem>>, %arg4: memref<128x128xf32, #tpu.memory_space<vmem>>, %arg5: memref<128x128xf32, #tpu.memory_space<vmem>>, %arg6: memref<1x128xf32, #tpu.memory_space<vmem>>, %arg7: memref<1x128xf32, #tpu.memory_space<vmem>>, %arg8: memref<1x128x128xf32, #tpu.memory_space<vmem>>, %arg9: memref<1x1x128xf32, #tpu.memory_space<vmem>>, %arg10: memref<1x16x128xbf16, #tpu.memory_space<vmem>>, %arg11: memref<128x128xbf16, #tpu.memory_space<vmem>>, %arg12: memref<1x128xf32, #tpu.memory_space<vmem>>) attributes {dimension_semantics = [#tpu.dimension_semantics<parallel>, #tpu.dimension_semantics<parallel>, #tpu.dimension_semantics<arbitrary>], iteration_bounds = array<i64: 4, 1, 2>, scalar_prefetch = 0 : i64, scratch_operands = 2 : i64, tpu.core_type = #tpu.core_type<tc>, window_params = [{transform_indices = @transform_0, window_bounds = array<i64: 16, 128>}, {transform_indices = @transform_1, window_bounds = array<i64: 128, 128>}, {transform_indices = @transform_2, window_bounds = array<i64: 128, 128>}, {transform_indices = @transform_3, window_bounds = array<i64: 1, 128>}, {transform_indices = @transform_4, window_bounds = array<i64: 1, 128>}, {transform_indices = @transform_5, window_bounds = array<i64: 1, 128, 128>}, {transform_indices = @transform_6, window_bounds = array<i64: 1, 1, 128>}, {transform_indices = @transform_7, window_bounds = array<i64: 1, 16, 128>}]} {
    %c0_i32 = arith.constant 0 : i32
    %0 = arith.cmpi eq, %arg2, %c0_i32 : i32
    %1 = arith.extui %0 : i1 to i32
    %c0_i32_0 = arith.constant 0 : i32
    %2 = arith.cmpi ne, %1, %c0_i32_0 : i32
    scf.if %2 {
      %c0_10 = arith.constant 0 : index
      %c0_11 = arith.constant 0 : index
      %15 = vector.load %arg4[%c0_10, %c0_11] : memref<128x128xf32, #tpu.memory_space<vmem>>, vector<128x128xf32>
      %c0_12 = arith.constant 0 : index
      %c0_13 = arith.constant 0 : index
      %16 = vector.load %arg5[%c0_12, %c0_13] : memref<128x128xf32, #tpu.memory_space<vmem>>, vector<128x128xf32>
      %c0_14 = arith.constant 0 : index
      %c0_15 = arith.constant 0 : index
      %c0_16 = arith.constant 0 : index
      %17 = vector.load %arg8[%c0_14, %c0_15, %c0_16] : memref<1x128x128xf32, #tpu.memory_space<vmem>>, vector<1x128x128xf32>
      %18 = vector.shape_cast %17 : vector<1x128x128xf32> to vector<128x128xf32>
      %19 = arith.mulf %16, %18 : vector<128x128xf32>
      %20 = arith.addf %15, %19 : vector<128x128xf32>
      %21 = arith.truncf %20 : vector<128x128xf32> to vector<128x128xbf16>
      %c0_17 = arith.constant 0 : index
      %c0_18 = arith.constant 0 : index
      %22 = vector.load %arg11[%c0_17, %c0_18] : memref<128x128xbf16, #tpu.memory_space<vmem>>, vector<128x128xbf16>
      tpu.vector_store %arg11[%c0_17, %c0_18], %21 {strides = array<i32>} : memref<128x128xbf16, #tpu.memory_space<vmem>>, vector<128x128xbf16>,
      %c0_19 = arith.constant 0 : index
      %c0_20 = arith.constant 0 : index
      %23 = vector.load %arg6[%c0_19, %c0_20] : memref<1x128xf32, #tpu.memory_space<vmem>>, vector<1x128xf32>
      %c0_21 = arith.constant 0 : index
      %c0_22 = arith.constant 0 : index
      %24 = vector.load %arg7[%c0_21, %c0_22] : memref<1x128xf32, #tpu.memory_space<vmem>>, vector<1x128xf32>
      %c0_23 = arith.constant 0 : index
      %c0_24 = arith.constant 0 : index
      %c0_25 = arith.constant 0 : index
      %25 = vector.load %arg9[%c0_23, %c0_24, %c0_25] : memref<1x1x128xf32, #tpu.memory_space<vmem>>, vector<1x1x128xf32>
      %26 = vector.shape_cast %25 : vector<1x1x128xf32> to vector<1x128xf32>
      %27 = arith.mulf %24, %26 : vector<1x128xf32>
      %28 = arith.addf %23, %27 : vector<1x128xf32>
      %c0_26 = arith.constant 0 : index
      %c0_27 = arith.constant 0 : index
      %29 = vector.load %arg12[%c0_26, %c0_27] : memref<1x128xf32, #tpu.memory_space<vmem>>, vector<1x128xf32>
      tpu.vector_store %arg12[%c0_26, %c0_27], %28 {strides = array<i32>} : memref<1x128xf32, #tpu.memory_space<vmem>>, vector<1x128xf32>,
    } else {
    }
    %c0 = arith.constant 0 : index
    %c0_1 = arith.constant 0 : index
    %3 = vector.load %arg3[%c0, %c0_1] : memref<16x128xbf16, #tpu.memory_space<vmem>>, vector<16x128xbf16>
    %c0_2 = arith.constant 0 : index
    %c0_3 = arith.constant 0 : index
    %4 = vector.load %arg11[%c0_2, %c0_3] : memref<128x128xbf16, #tpu.memory_space<vmem>>, vector<128x128xbf16>
    %cst = arith.constant dense<0.000000e+00> : vector<16x128xf32>
    %5 = tpu.matmul %3, %4, %cst {dimension_numbers = #tpu.dot_dimension_numbers<[1], [0], [0], [1], [0, 0, 1, 1], [], []>} : vector<16x128xbf16>, vector<128x128xbf16>, vector<16x128xf32> -> vector<16x128xf32>
    %c0_4 = arith.constant 0 : index
    %c0_5 = arith.constant 0 : index
    %6 = vector.load %arg12[%c0_4, %c0_5] : memref<1x128xf32, #tpu.memory_space<vmem>>, vector<1x128xf32>
    %7 = vector.broadcast %6 : vector<1x128xf32> to vector<16x128xf32>
    %8 = arith.addf %5, %7 : vector<16x128xf32>
    %cst_6 = arith.constant 0.000000e+00 : f32
    %9 = vector.broadcast %cst_6 : f32 to vector<16x128xf32>
    %10 = arith.maximumf %8, %9 : vector<16x128xf32>
    %11 = arith.truncf %10 : vector<16x128xf32> to vector<16x128xbf16>
    %c0_7 = arith.constant 0 : index
    %c0_8 = arith.constant 0 : index
    %c0_9 = arith.constant 0 : index
    %12 = vector.load %arg10[%c0_7, %c0_8, %c0_9] : memref<1x16x128xbf16, #tpu.memory_space<vmem>>, vector<1x16x128xbf16>
    %13 = vector.shape_cast %12 : vector<1x16x128xbf16> to vector<16x128xbf16>
    %14 = vector.shape_cast %11 : vector<16x128xbf16> to vector<1x16x128xbf16>
    tpu.vector_store %arg10[%c0_7, %c0_8, %c0_9], %14 {strides = array<i32>} : memref<1x16x128xbf16, #tpu.memory_space<vmem>>, vector<1x16x128xbf16>,
    return
  }
  func.func @transform_0(%arg0: i32, %arg1: i32, %arg2: i32) -> (i32, i32) {
    %c0_i32 = arith.constant 0 : i32
    %c0_i32_0 = arith.constant 0 : i32
    return %arg2, %c0_i32 : i32, i32
  }
  func.func @transform_1(%arg0: i32, %arg1: i32, %arg2: i32) -> (i32, i32) {
    %c0_i32 = arith.constant 0 : i32
    %c0_i32_0 = arith.constant 0 : i32
    return %c0_i32, %arg1 : i32, i32
  }
  func.func @transform_2(%arg0: i32, %arg1: i32, %arg2: i32) -> (i32, i32) {
    %c0_i32 = arith.constant 0 : i32
    %c0_i32_0 = arith.constant 0 : i32
    return %c0_i32, %arg1 : i32, i32
  }
  func.func @transform_3(%arg0: i32, %arg1: i32, %arg2: i32) -> (i32, i32) {
    %c0_i32 = arith.constant 0 : i32
    %c0_i32_0 = arith.constant 0 : i32
    return %c0_i32, %arg1 : i32, i32
  }
  func.func @transform_4(%arg0: i32, %arg1: i32, %arg2: i32) -> (i32, i32) {
    %c0_i32 = arith.constant 0 : i32
    %c0_i32_0 = arith.constant 0 : i32
    return %c0_i32, %arg1 : i32, i32
  }
  func.func @transform_5(%arg0: i32, %arg1: i32, %arg2: i32) -> (i32, i32, i32) {
    %c0_i32 = arith.constant 0 : i32
    %c0_i32_0 = arith.constant 0 : i32
    return %arg0, %c0_i32, %arg1 : i32, i32, i32
  }
  func.func @transform_6(%arg0: i32, %arg1: i32, %arg2: i32) -> (i32, i32, i32) {
    %c0_i32 = arith.constant 0 : i32
    %c0_i32_0 = arith.constant 0 : i32
    return %arg0, %c0_i32, %arg1 : i32, i32, i32
  }
  func.func @transform_7(%arg0: i32, %arg1: i32, %arg2: i32) -> (i32, i32, i32) {
    %c0_i32 = arith.constant 0 : i32
    return %arg0, %arg2, %arg1 : i32, i32, i32
  }
}

</mosaic_0001>

<llo_original>
// kernel: tpu_custom_call.1
$region0: #{tpu_custom_call.1}
  #allocation0 [shape = 'u32[]', space=smem, size = 0x4, offset = 0x4, fixed_abs, tag = 'smem constant byte address 0x4 - core index']
  #allocation1 [shape = 'u32[72,128]{1,0:T(1,128)}', space=vmem, size = 0x9000, scoped, tag = 'internal scratch']
  #allocation2 [shape = 'bf16[128,128]{1,0:T(8,128)(2,1)}', space=vmem, size = 0x8000, scoped, tag = 'scratch operand']
  #allocation3 [shape = 'f32[1,128]{1,0:T(1,128)}', space=vmem, size = 0x200, scoped, tag = 'scratch operand']
  %s0 = inlined_call_operand.hbm [shape: bf16[32,128], index: 0, kind: input, shape index: {}]
  %s1 = inlined_call_operand.hbm [shape: f32[128,128], index: 1, kind: input, shape index: {}]
  %s2 = inlined_call_operand.hbm [shape: f32[128,128], index: 2, kind: input, shape index: {}]
  %s3 = inlined_call_operand.vmem [shape: f32[1,128], index: 3, kind: input, shape index: {}]
  %s4 = inlined_call_operand.hbm [shape: f32[1,128], index: 4, kind: input, shape index: {}]
  %s5 = inlined_call_operand.hbm [shape: f32[4,128,128], index: 5, kind: input, shape index: {}]
  %s6 = inlined_call_operand.vmem [shape: f32[4,1,128], index: 6, kind: input, shape index: {}]
  %s7 = inlined_call_operand.hbm [shape: bf16[4,32,128], index: 7, kind: output, shape index: {}]
  %s8 = sld [smem:[#allocation0]]
  $region85: #{tpu_custom_call.1} parent=0
    _
  %s10 = ssub.s32 1, %s8
  %s11 = scalar_select 0, %s10, %s8
  $region1: #{tpu_custom_call.1} parent=0
    #allocation4 [shape = 'u8[8192]{0}', space=vmem, size = 0x2000, scoped, tag = 'input window, operand 0']
    #allocation5 [shape = 's32[2]{0}', space=sflag, size = 0x8, scoped, tag = 'scoped memory for tpu_custom_call.1']
    #allocation6 [shape = 's32[2]{0}', space=sflag, size = 0x8, scoped, tag = 'scoped memory for tpu_custom_call.1']
    #allocation7 [shape = 'u8[65536]{0}', space=vmem, size = 0x10000, scoped, tag = 'input window, operand 1, single buffered']
    #allocation8 [shape = 's32[1]{0}', space=sflag, size = 0x4, scoped, tag = 'scoped memory for tpu_custom_call.1']
    #allocation9 [shape = 'u8[65536]{0}', space=vmem, size = 0x10000, scoped, tag = 'input window, operand 2, single buffered']
    #allocation10 [shape = 'u8[512]{0}', space=vmem, size = 0x400, scoped, tag = 'input window, operand 4, single buffered']
    #allocation11 [shape = 's32[1]{0}', space=sflag, size = 0x4, scoped, tag = 'scoped memory for tpu_custom_call.1']
    #allocation12 [shape = 'u8[131072]{0}', space=vmem, size = 0x20000, scoped, tag = 'input window, operand 5']
    #allocation13 [shape = 'u8[8192]{0}', space=vmem, size = 0x2000, scoped, tag = 'output window, operand 0']
    %12 = vsyncpa [#allocation5], 0
    %s13 = scalar_lea.sflag [#allocation5], 1
    %14 = vsyncpa %s13, 0
    %15 = vsyncpa [#allocation8], 0
    %16 = vsyncpa [#allocation11], 0
    %17 = vsyncpa [#allocation6], 0
    %s18 = scalar_lea.sflag [#allocation6], 1
    %19 = vsyncpa %s18, 0
    loop: start=0, step=1, limit=10
    $region2: #{tpu_custom_call.1} parent=1 // loop_pre_header
      _
    $region3: #{tpu_custom_call.1} parent=1 // loop_header
      %s21 = sphi 0, %s25
      %p22 = scmp.ge.s32.totalorder %s21, 10
      %s28 = sphi 0, %s47
      %s29 = sphi 0, %s43
      %s30 = sphi 0, %s39
      %s31 = sphi 0, %s28
      %s32 = sphi 0, %s29
      %s33 = sphi 0, %s30
      %s34 = sphi 0, %s31
      %s35 = sphi 0, %s32
      %s36 = sphi 0, %s33
      %s50 = sphi 0, %s52
      %s53 = sphi 0, %s50
      %s54 = sphi 0, %s53
      %s70 = sphi 0, %s54
      %s76 = sphi 0, %s78
      %s79 = sphi 0, %s76
      %s80 = sphi 0, %s79
      %s96 = sphi 0, %s80
      %s102 = sphi 0, %s104
      %s105 = sphi 0, %s102
      %s106 = sphi 0, %s105
      %s122 = sphi 0, %s106
      %s128 = sphi 0, %s130
      %s131 = sphi 0, %s128
      %s132 = sphi 0, %s131
      %s148 = sphi 0, %s132
      %s154 = sphi 0, %s156
      %s157 = sphi 0, %s154
      %s158 = sphi 0, %s157
      %s174 = sphi 0, %s158
      %s182 = sphi 0, %s184
      %s185 = sphi 0, %s182
      %s186 = sphi 0, %s185
      %s202 = sphi 0, %s186
      %s210 = sphi 0, %s212
      %s213 = sphi 0, %s210
      %s214 = sphi 0, %s213
      %s230 = sphi 0, %s214
      %s240 = sphi 0, %s242
      %s243 = sphi 0, %s240
      %s244 = sphi 0, %s243
      %s260 = sphi 0, %s244
    $region4: #{tpu_custom_call.1} parent=1 // loop_header_branch
      %24 = sbr.rel (%p22) target = $region8
    $region5: #{tpu_custom_call.1} parent=1 // loop_body
      %s26 = ssub.s32 %s21, 1
      %s27 = ssub.s32 %s21, 2
      %s37 = sadd.s32 1, %s30
      %p38 = scmp.ge.s32.totalorder %s37, 2
      %s39 = scalar_select %p38, 0, %s37
      %s40 = sadd.s32 1, %s29
      %s41 = scalar_select %p38, %s40, %s29
      %p42 = scmp.ge.s32.totalorder %s41, 1
      %s43 = scalar_select %p42, 0, %s41
      %s44 = sadd.s32 1, %s28
      %s45 = scalar_select %p42, %s44, %s28
      %p46 = scmp.ge.s32.totalorder %s45, 4
      %s47 = scalar_select %p46, 0, %s45
      %s48 = ssub.s32 %s30, %s39
      %p49 = scmp.eq.s32.totalorder %s48, 0
      %s51 = sadd.s32 %s50, 1
      %s52 = scalar_select %p49, %s50, %s51
      %p55 = pneg %p49
      %p56 = scmp.eq.s32.totalorder %s21, 7
      %p57 = por %p55, %p56
      %p58 = scmp.ne.s32.totalorder %s50, %s53
      %p59 = scmp.eq.s32.totalorder %s21, 0
      %p60 = por %p58, %p59
      %p61 = scmp.ne.s32.totalorder %s50, %s53
      %p62 = scmp.eq.s32.totalorder %s26, 7
      %p63 = por %p61, %p62
      %p64 = scmp.ne.s32.totalorder %s53, %s54
      %p65 = scmp.eq.s32.totalorder %s26, 0
      %p66 = por %p64, %p65
      %p67 = scmp.ne.s32.totalorder %s53, %s54
      %p68 = scmp.eq.s32.totalorder %s27, 7
      %p69 = por %p67, %p68
      %p71 = scmp.ne.s32.totalorder %s54, %s70
      %p72 = scmp.eq.s32.totalorder %s27, 0
      %p73 = por %p71, %p72
      %s74 = ssub.s32 %s29, %s43
      %p75 = scmp.eq.s32.totalorder %s74, 0
      %s77 = sadd.s32 %s76, 1
      %s78 = scalar_select %p75, %s76, %s77
      %p81 = pneg %p75
      %p82 = scmp.eq.s32.totalorder %s21, 7
      %p83 = por %p81, %p82
      %p84 = scmp.ne.s32.totalorder %s76, %s79
      %p85 = scmp.eq.s32.totalorder %s21, 0
      %p86 = por %p84, %p85
      %p87 = scmp.ne.s32.totalorder %s76, %s79
      %p88 = scmp.eq.s32.totalorder %s26, 7
      %p89 = por %p87, %p88
      %p90 = scmp.ne.s32.totalorder %s79, %s80
      %p91 = scmp.eq.s32.totalorder %s26, 0
      %p92 = por %p90, %p91
      %p93 = scmp.ne.s32.totalorder %s79, %s80
      %p94 = scmp.eq.s32.totalorder %s27, 7
      %p95 = por %p93, %p94
      %p97 = scmp.ne.s32.totalorder %s80, %s96
      %p98 = scmp.eq.s32.totalorder %s27, 0
      %p99 = por %p97, %p98
      %s100 = ssub.s32 %s29, %s43
      %p101 = scmp.eq.s32.totalorder %s100, 0
      %s103 = sadd.s32 %s102, 1
      %s104 = scalar_select %p101, %s102, %s103
      %p107 = pneg %p101
      %p108 = scmp.eq.s32.totalorder %s21, 7
      %p109 = por %p107, %p108
      %p110 = scmp.ne.s32.totalorder %s102, %s105
      %p111 = scmp.eq.s32.totalorder %s21, 0
      %p112 = por %p110, %p111
      %p113 = scmp.ne.s32.totalorder %s102, %s105
      %p114 = scmp.eq.s32.totalorder %s26, 7
      %p115 = por %p113, %p114
      %p116 = scmp.ne.s32.totalorder %s105, %s106
      %p117 = scmp.eq.s32.totalorder %s26, 0
      %p118 = por %p116, %p117
      %p119 = scmp.ne.s32.totalorder %s105, %s106
      %p120 = scmp.eq.s32.totalorder %s27, 7
      %p121 = por %p119, %p120
      %p123 = scmp.ne.s32.totalorder %s106, %s122
      %p124 = scmp.eq.s32.totalorder %s27, 0
      %p125 = por %p123, %p124
      %s126 = ssub.s32 %s29, %s43
      %p127 = scmp.eq.s32.totalorder %s126, 0
      %s129 = sadd.s32 %s128, 1
      %s130 = scalar_select %p127, %s128, %s129
      %p133 = pneg %p127
      %p134 = scmp.eq.s32.totalorder %s21, 7
      %p135 = por %p133, %p134
      %p136 = scmp.ne.s32.totalorder %s128, %s131
      %p137 = scmp.eq.s32.totalorder %s21, 0
      %p138 = por %p136, %p137
      %p139 = scmp.ne.s32.totalorder %s128, %s131
      %p140 = scmp.eq.s32.totalorder %s26, 7
      %p141 = por %p139, %p140
      %p142 = scmp.ne.s32.totalorder %s131, %s132
      %p143 = scmp.eq.s32.totalorder %s26, 0
      %p144 = por %p142, %p143
      %p145 = scmp.ne.s32.totalorder %s131, %s132
      %p146 = scmp.eq.s32.totalorder %s27, 7
      %p147 = por %p145, %p146
      %p149 = scmp.ne.s32.totalorder %s132, %s148
      %p150 = scmp.eq.s32.totalorder %s27, 0
      %p151 = por %p149, %p150
      %s152 = ssub.s32 %s29, %s43
      %p153 = scmp.eq.s32.totalorder %s152, 0
      %s155 = sadd.s32 %s154, 1
      %s156 = scalar_select %p153, %s154, %s155
      %p159 = pneg %p153
      %p160 = scmp.eq.s32.totalorder %s21, 7
      %p161 = por %p159, %p160
      %p162 = scmp.ne.s32.totalorder %s154, %s157
      %p163 = scmp.eq.s32.totalorder %s21, 0
      %p164 = por %p162, %p163
      %p165 = scmp.ne.s32.totalorder %s154, %s157
      %p166 = scmp.eq.s32.totalorder %s26, 7
      %p167 = por %p165, %p166
      %p168 = scmp.ne.s32.totalorder %s157, %s158
      %p169 = scmp.eq.s32.totalorder %s26, 0
      %p170 = por %p168, %p169
      %p171 = scmp.ne.s32.totalorder %s157, %s158
      %p172 = scmp.eq.s32.totalorder %s27, 7
      %p173 = por %p171, %p172
      %p175 = scmp.ne.s32.totalorder %s158, %s174
      %p176 = scmp.eq.s32.totalorder %s27, 0
      %p177 = por %p175, %p176
      %s178 = ssub.s32 %s28, %s47
      %s179 = ssub.s32 %s29, %s43
      %s180 = sor.u32 %s178, %s179
      %p181 = scmp.eq.s32.totalorder %s180, 0
      %s183 = sadd.s32 %s182, 1
      %s184 = scalar_select %p181, %s182, %s183
      %p187 = pneg %p181
      %p188 = scmp.eq.s32.totalorder %s21, 7
      %p189 = por %p187, %p188
      %p190 = scmp.ne.s32.totalorder %s182, %s185
      %p191 = scmp.eq.s32.totalorder %s21, 0
      %p192 = por %p190, %p191
      %p193 = scmp.ne.s32.totalorder %s182, %s185
      %p194 = scmp.eq.s32.totalorder %s26, 7
      %p195 = por %p193, %p194
      %p196 = scmp.ne.s32.totalorder %s185, %s186
      %p197 = scmp.eq.s32.totalorder %s26, 0
      %p198 = por %p196, %p197
      %p199 = scmp.ne.s32.totalorder %s185, %s186
      %p200 = scmp.eq.s32.totalorder %s27, 7
      %p201 = por %p199, %p200
      %p203 = scmp.ne.s32.totalorder %s186, %s202
      %p204 = scmp.eq.s32.totalorder %s27, 0
      %p205 = por %p203, %p204
      %s206 = ssub.s32 %s28, %s47
      %s207 = ssub.s32 %s29, %s43
      %s208 = sor.u32 %s206, %s207
      %p209 = scmp.eq.s32.totalorder %s208, 0
      %s211 = sadd.s32 %s210, 1
      %s212 = scalar_select %p209, %s210, %s211
      %p215 = pneg %p209
      %p216 = scmp.eq.s32.totalorder %s21, 7
      %p217 = por %p215, %p216
      %p218 = scmp.ne.s32.totalorder %s210, %s213
      %p219 = scmp.eq.s32.totalorder %s21, 0
      %p220 = por %p218, %p219
      %p221 = scmp.ne.s32.totalorder %s210, %s213
      %p222 = scmp.eq.s32.totalorder %s26, 7
      %p223 = por %p221, %p222
      %p224 = scmp.ne.s32.totalorder %s213, %s214
      %p225 = scmp.eq.s32.totalorder %s26, 0
      %p226 = por %p224, %p225
      %p227 = scmp.ne.s32.totalorder %s213, %s214
      %p228 = scmp.eq.s32.totalorder %s27, 7
      %p229 = por %p227, %p228
      %p231 = scmp.ne.s32.totalorder %s214, %s230
      %p232 = scmp.eq.s32.totalorder %s27, 0
      %p233 = por %p231, %p232
      %s234 = ssub.s32 %s28, %s47
      %s235 = ssub.s32 %s30, %s39
      %s236 = sor.u32 %s234, %s235
      %s237 = ssub.s32 %s29, %s43
      %s238 = sor.u32 %s236, %s237
      %p239 = scmp.eq.s32.totalorder %s238, 0
      %s241 = sadd.s32 %s240, 1
      %s242 = scalar_select %p239, %s240, %s241
      %p245 = pneg %p239
      %p246 = scmp.eq.s32.totalorder %s21, 7
      %p247 = por %p245, %p246
      %p248 = scmp.ne.s32.totalorder %s240, %s243
      %p249 = scmp.eq.s32.totalorder %s21, 0
      %p250 = por %p248, %p249
      %p251 = scmp.ne.s32.totalorder %s240, %s243
      %p252 = scmp.eq.s32.totalorder %s26, 7
      %p253 = por %p251, %p252
      %p254 = scmp.ne.s32.totalorder %s243, %s244
      %p255 = scmp.eq.s32.totalorder %s26, 0
      %p256 = por %p254, %p255
      %p257 = scmp.ne.s32.totalorder %s243, %s244
      %p258 = scmp.eq.s32.totalorder %s27, 7
      %p259 = por %p257, %p258
      %p261 = scmp.ne.s32.totalorder %s244, %s260
      %p262 = scmp.eq.s32.totalorder %s27, 0
      %p263 = por %p261, %p262
      %p264 = scmp.le.s32.totalorder 1, %s21
      %p265 = scmp.lt.s32.totalorder %s21, 9
      %p266 = pnand %p264, %p265
      %p267 = pneg %p266
      // Predicated region
      $region9: #{tpu_custom_call.1} parent=5 // pred_check
        _
      $region10: #{tpu_custom_call.1} parent=5 // pred_check_branch
        %269 = sbr.rel (%p266) target = $region12
      $region11: #{tpu_custom_call.1} parent=5 // pred_region
        %s270 = ssub.s32 %s21, 1
        // Predicated region
        $region13: #{tpu_custom_call.1} parent=11 // pred_check
          %p271 = pneg %p92
        $region14: #{tpu_custom_call.1} parent=11 // pred_check_branch
          %273 = sbr.rel (%p271) target = $region16
        $region15: #{tpu_custom_call.1} parent=11 // pred_region
          %275 = vsyncadd [#allocation8], 0
          %s276 = smul.addr %s32, 8
          %s277 = scalar_lea.hbm %s1, %s276
          %s278 = sshll.u32 %s277, 4
          %s279 = int_to_ptr.hbm [resolvable:$true] %s278
          %s280 = sshll.u32 [#allocation7], 4
          %s281 = int_to_ptr.vmem [resolvable:$true] %s280
          %286 = dma.hbm_to_vmem [thread:$0]  %s279, 2048, %s281, [#allocation8], 128, 128, 8
        $region16: #{tpu_custom_call.1} parent=11 // pred_fallthru
          _
        // Predicated region
        $region17: #{tpu_custom_call.1} parent=11 // pred_check
          %p287 = pneg %p118
        $region18: #{tpu_custom_call.1} parent=11 // pred_check_branch
          %289 = sbr.rel (%p287) target = $region20
        $region19: #{tpu_custom_call.1} parent=11 // pred_region
          %291 = vsyncadd [#allocation8], 0
          %s292 = smul.addr %s32, 8
          %s293 = scalar_lea.hbm %s2, %s292
          %s294 = sshll.u32 %s293, 4
          %s295 = int_to_ptr.hbm [resolvable:$true] %s294
          %s296 = sshll.u32 [#allocation9], 4
          %s297 = int_to_ptr.vmem [resolvable:$true] %s296
          %302 = dma.hbm_to_vmem [thread:$0]  %s295, 2048, %s297, [#allocation8], 128, 128, 8
        $region20: #{tpu_custom_call.1} parent=11 // pred_fallthru
          _
        // Predicated region
        $region21: #{tpu_custom_call.1} parent=11 // pred_check
          %p303 = pneg %p144
        $region22: #{tpu_custom_call.1} parent=11 // pred_check_branch
          %305 = sbr.rel (%p303) target = $region24
        $region23: #{tpu_custom_call.1} parent=11 // pred_region
          %p306 = scmp.lt.s32.totalorder %s32, 0
          %s307 = scalar_select %p306, %s32, 0
          %s308 = scalar_lea.vmem %s3, %s307
        $region24: #{tpu_custom_call.1} parent=11 // pred_fallthru
          _
        // Predicated region
        $region25: #{tpu_custom_call.1} parent=11 // pred_check
          %p309 = pneg %p170
        $region26: #{tpu_custom_call.1} parent=11 // pred_check_branch
          %311 = sbr.rel (%p309) target = $region28
        $region27: #{tpu_custom_call.1} parent=11 // pred_region
          %313 = vsyncadd [#allocation11], 0
          %s314 = scalar_lea.hbm %s4, %s32
          %s316 = sshll.u32 %s314, 4
          %s317 = int_to_ptr.hbm [resolvable:$true] %s316
          %s318 = sshll.u32 [#allocation10], 4
          %s319 = int_to_ptr.vmem [resolvable:$true] %s318
          %321 = dma.hbm_to_vmem [thread:$0]  %s317, 16, %s319, [#allocation11]
        $region28: #{tpu_custom_call.1} parent=11 // pred_fallthru
          _
      $region12: #{tpu_custom_call.1} parent=5 // pred_fallthru
        _
      %p322 = scmp.lt.s32.totalorder %s21, 8
      // Predicated region
      $region29: #{tpu_custom_call.1} parent=5 // pred_check
        %p323 = pneg %p322
      $region30: #{tpu_custom_call.1} parent=5 // pred_check_branch
        %325 = sbr.rel (%p323) target = $region32
      $region31: #{tpu_custom_call.1} parent=5 // pred_region
        // Predicated region
        $region33: #{tpu_custom_call.1} parent=31 // pred_check
          %p326 = pneg %p60
        $region34: #{tpu_custom_call.1} parent=31 // pred_check_branch
          %328 = sbr.rel (%p326) target = $region36
        $region35: #{tpu_custom_call.1} parent=31 // pred_region
          %s329 = sand.u32 %s21, 1
          %s330 = scalar_lea.sflag [#allocation5], %s329
          %s331 = sand.u32 %s50, 1
          %s332 = smul.addr %s331, 8
          %s333 = scalar_lea.vmem [#allocation4], %s332
          %s334 = smul.u32 2, %s30
          %336 = vsyncadd %s330, 0
          %s337 = smul.addr %s334, 4
          %s338 = scalar_lea.hbm %s0, %s337
          %s339 = sshll.u32 %s338, 4
          %s340 = int_to_ptr.hbm [resolvable:$true] %s339
          %s341 = sshll.u32 %s333, 4
          %s342 = int_to_ptr.vmem [resolvable:$true] %s341
          %347 = dma.hbm_to_vmem [thread:$0]  %s340, 128, %s342, %s330, 64, 64, 4
        $region36: #{tpu_custom_call.1} parent=31 // pred_fallthru
          _
        // Predicated region
        $region37: #{tpu_custom_call.1} parent=31 // pred_check
          %p348 = pneg %p192
        $region38: #{tpu_custom_call.1} parent=31 // pred_check_branch
          %350 = sbr.rel (%p348) target = $region40
        $region39: #{tpu_custom_call.1} parent=31 // pred_region
          %s351 = sand.u32 %s21, 1
          %s352 = scalar_lea.sflag [#allocation5], %s351
          %s353 = sand.u32 %s182, 1
          %s354 = smul.addr %s353, 128
          %s355 = scalar_lea.vmem [#allocation12], %s354
          %357 = vsyncadd %s352, 0
          %s358 = smul.addr %s28, 16
          %s359 = sadd.s32 %s29, %s358
          %s360 = smul.addr %s359, 8
          %s361 = scalar_lea.hbm %s5, %s360
          %s362 = sshll.u32 %s361, 4
          %s363 = int_to_ptr.hbm [resolvable:$true] %s362
          %s364 = sshll.u32 %s355, 4
          %s365 = int_to_ptr.vmem [resolvable:$true] %s364
          %370 = dma.hbm_to_vmem [thread:$0]  %s363, 2048, %s365, %s352, 128, 128, 8
        $region40: #{tpu_custom_call.1} parent=31 // pred_fallthru
          _
        // Predicated region
        $region41: #{tpu_custom_call.1} parent=31 // pred_check
          %p371 = pneg %p220
        $region42: #{tpu_custom_call.1} parent=31 // pred_check_branch
          %373 = sbr.rel (%p371) target = $region44
        $region43: #{tpu_custom_call.1} parent=31 // pred_region
          %p374 = scmp.lt.s32.totalorder %s28, 3
          %s375 = scalar_select %p374, %s28, 3
          %p376 = scmp.lt.s32.totalorder %s29, 0
          %s377 = scalar_select %p376, %s29, 0
          %s378 = sadd.s32 %s377, %s375
          %s379 = scalar_lea.vmem %s6, %s378
        $region44: #{tpu_custom_call.1} parent=31 // pred_fallthru
          _
      $region32: #{tpu_custom_call.1} parent=5 // pred_fallthru
        _
      %p380 = scmp.le.s32.totalorder 1, %s21
      %p381 = scmp.lt.s32.totalorder %s21, 9
      %p382 = pnand %p380, %p381
      %p383 = pneg %p382
      // Predicated region
      $region45: #{tpu_custom_call.1} parent=5 // pred_check
        _
      $region46: #{tpu_custom_call.1} parent=5 // pred_check_branch
        %385 = sbr.rel (%p382) target = $region48
      $region47: #{tpu_custom_call.1} parent=5 // pred_region
        %s386 = ssub.s32 %s21, 1
        %s387 = sand.u32 %s26, 1
        %s388 = scalar_lea.sflag [#allocation5], %s387
        %s389 = sand.u32 %s53, 1
        %s390 = smul.addr %s389, 8
        %s391 = scalar_lea.vmem [#allocation4], %s390
        // Predicated region
        $region49: #{tpu_custom_call.1} parent=47 // pred_check
          %p392 = pneg %p66
        $region50: #{tpu_custom_call.1} parent=47 // pred_check_branch
          %394 = sbr.rel (%p392) target = $region52
        $region51: #{tpu_custom_call.1} parent=47 // pred_region
          %396 = dma.done %s388, 128
        $region52: #{tpu_custom_call.1} parent=47 // pred_fallthru
          _
        // Predicated region
        $region53: #{tpu_custom_call.1} parent=47 // pred_check
          %p397 = pneg %p92
        $region54: #{tpu_custom_call.1} parent=47 // pred_check_branch
          %399 = sbr.rel (%p397) target = $region56
        $region55: #{tpu_custom_call.1} parent=47 // pred_region
          %401 = dma.done [#allocation8], 2048
        $region56: #{tpu_custom_call.1} parent=47 // pred_fallthru
          _
        // Predicated region
        $region57: #{tpu_custom_call.1} parent=47 // pred_check
          %p402 = pneg %p118
        $region58: #{tpu_custom_call.1} parent=47 // pred_check_branch
          %404 = sbr.rel (%p402) target = $region60
        $region59: #{tpu_custom_call.1} parent=47 // pred_region
          %406 = dma.done [#allocation8], 2048
        $region60: #{tpu_custom_call.1} parent=47 // pred_fallthru
          _
        // Predicated region
        $region61: #{tpu_custom_call.1} parent=47 // pred_check
          %p407 = pneg %p170
        $region62: #{tpu_custom_call.1} parent=47 // pred_check_branch
          %409 = sbr.rel (%p407) target = $region64
        $region63: #{tpu_custom_call.1} parent=47 // pred_region
          %411 = dma.done [#allocation11], 16
        $region64: #{tpu_custom_call.1} parent=47 // pred_fallthru
          _
        %s412 = sand.u32 %s26, 1
        %s413 = scalar_lea.sflag [#allocation5], %s412
        %s414 = sand.u32 %s185, 1
        %s415 = smul.addr %s414, 128
        %s416 = scalar_lea.vmem [#allocation12], %s415
        // Predicated region
        $region65: #{tpu_custom_call.1} parent=47 // pred_check
          %p417 = pneg %p198
        $region66: #{tpu_custom_call.1} parent=47 // pred_check_branch
          %419 = sbr.rel (%p417) target = $region68
        $region67: #{tpu_custom_call.1} parent=47 // pred_region
          %421 = dma.done %s413, 2048
        $region68: #{tpu_custom_call.1} parent=47 // pred_fallthru
          _
        %s422 = sand.u32 %s26, 1
        %s423 = scalar_lea.sflag [#allocation5], %s422
        %s424 = sand.u32 %s53, 1
        %s425 = smul.addr %s424, 8
        %s426 = scalar_lea.vmem [#allocation4], %s425
        %p427 = pneg %p66
        %p428 = pneg %p63
        %p429 = pneg %p92
        %p430 = pneg %p89
        %p431 = pneg %p118
        %p432 = pneg %p115
        %p433 = scmp.lt.s32.totalorder %s32, 0
        %s434 = scalar_select %p433, %s32, 0
        %s435 = scalar_lea.vmem %s3, %s434
        %p436 = pneg %p144
        %p437 = pneg %p141
        %p438 = pneg %p170
        %p439 = pneg %p167
        %s440 = sand.u32 %s26, 1
        %s441 = scalar_lea.sflag [#allocation5], %s440
        %s442 = sand.u32 %s185, 1
        %s443 = smul.addr %s442, 128
        %s444 = scalar_lea.vmem [#allocation12], %s443
        %p445 = pneg %p198
        %p446 = pneg %p195
        %p447 = scmp.lt.s32.totalorder %s31, 3
        %s448 = scalar_select %p447, %s31, 3
        %p449 = scmp.lt.s32.totalorder %s32, 0
        %s450 = scalar_select %p449, %s32, 0
        %s451 = sadd.s32 %s450, %s448
        %s452 = scalar_lea.vmem %s6, %s451
        %p453 = pneg %p226
        %p454 = pneg %p223
        %p455 = pneg %p256
        %p456 = pneg %p253
        %s457 = sand.u32 %s243, 1
        %s458 = scalar_lea.sflag [#allocation6], %s457
        %s459 = sand.u32 %s243, 1
        %s460 = smul.addr %s459, 8
        %s461 = scalar_lea.vmem [#allocation13], %s460
        %s462 = smul.u32 2, %s33
        %p463 = scmp.lt.s32.totalorder %s32, 0
        %s464 = scalar_select %p463, %s32, 0
        %s465 = scalar_lea.vmem %s3, %s464
        %p466 = scmp.lt.s32.totalorder %s31, 3
        %s467 = scalar_select %p466, %s31, 3
        %p468 = scmp.lt.s32.totalorder %s32, 0
        %s469 = scalar_select %p468, %s32, 0
        %s470 = sadd.s32 %s469, %s467
        %s471 = scalar_lea.vmem %s6, %s470
        %s472 = smul.u32 2, %s33
        %p473 = scmp.eq.s32.totalorder %s33, 0
        // Predicated region
        $region69: #{tpu_custom_call.1} parent=47 // pred_check
          %p474 = pneg %p473
        $region70: #{tpu_custom_call.1} parent=47 // pred_check_branch
          %476 = sbr.rel (%p474) target = $region72
        $region71: #{tpu_custom_call.1} parent=47 // pred_region
          %v477 = vld [vmem:[#allocation7] sm:$0xff]
          %v478 = vld [vmem:[#allocation7 + $0x8] sm:$0xff]
          %v479 = vld [vmem:[#allocation7 + $0x10] sm:$0xff]
          %v480 = vld [vmem:[#allocation7 + $0x18] sm:$0xff]
          %v481 = vld [vmem:[#allocation7 + $0x20] sm:$0xff]
          %v482 = vld [vmem:[#allocation7 + $0x28] sm:$0xff]
          %v483 = vld [vmem:[#allocation7 + $0x30] sm:$0xff]
          %v484 = vld [vmem:[#allocation7 + $0x38] sm:$0xff]
          %v485 = vld [vmem:[#allocation7 + $0x40] sm:$0xff]
          %v486 = vld [vmem:[#allocation7 + $0x48] sm:$0xff]
          %v487 = vld [vmem:[#allocation7 + $0x50] sm:$0xff]
          %v488 = vld [vmem:[#allocation7 + $0x58] sm:$0xff]
          %v489 = vld [vmem:[#allocation7 + $0x60] sm:$0xff]
          %v490 = vld [vmem:[#allocation7 + $0x68] sm:$0xff]
          %v491 = vld [vmem:[#allocation7 + $0x70] sm:$0xff]
          %v492 = vld [vmem:[#allocation7 + $0x78] sm:$0xff]
          %v493 = vld [vmem:[#allocation9] sm:$0xff]
          %v494 = vld [vmem:[#allocation9 + $0x8] sm:$0xff]
          %v495 = vld [vmem:[#allocation9 + $0x10] sm:$0xff]
          %v496 = vld [vmem:[#allocation9 + $0x18] sm:$0xff]
          %v497 = vld [vmem:[#allocation9 + $0x20] sm:$0xff]
          %v498 = vld [vmem:[#allocation9 + $0x28] sm:$0xff]
          %v499 = vld [vmem:[#allocation9 + $0x30] sm:$0xff]
          %v500 = vld [vmem:[#allocation9 + $0x38] sm:$0xff]
          %v501 = vld [vmem:[#allocation9 + $0x40] sm:$0xff]
          %v502 = vld [vmem:[#allocation9 + $0x48] sm:$0xff]
          %v503 = vld [vmem:[#allocation9 + $0x50] sm:$0xff]
          %v504 = vld [vmem:[#allocation9 + $0x58] sm:$0xff]
          %v505 = vld [vmem:[#allocation9 + $0x60] sm:$0xff]
          %v506 = vld [vmem:[#allocation9 + $0x68] sm:$0xff]
          %v507 = vld [vmem:[#allocation9 + $0x70] sm:$0xff]
          %v508 = vld [vmem:[#allocation9 + $0x78] sm:$0xff]
          %v509 = vld [vmem:[%s416] sm:$0xff]
          %v510 = vld [vmem:[%s416 + $0x8] sm:$0xff]
          %v511 = vld [vmem:[%s416 + $0x10] sm:$0xff]
          %v512 = vld [vmem:[%s416 + $0x18] sm:$0xff]
          %v513 = vld [vmem:[%s416 + $0x20] sm:$0xff]
          %v514 = vld [vmem:[%s416 + $0x28] sm:$0xff]
          %v515 = vld [vmem:[%s416 + $0x30] sm:$0xff]
          %v516 = vld [vmem:[%s416 + $0x38] sm:$0xff]
          %v517 = vld [vmem:[%s416 + $0x40] sm:$0xff]
          %v518 = vld [vmem:[%s416 + $0x48] sm:$0xff]
          %v519 = vld [vmem:[%s416 + $0x50] sm:$0xff]
          %v520 = vld [vmem:[%s416 + $0x58] sm:$0xff]
          %v521 = vld [vmem:[%s416 + $0x60] sm:$0xff]
          %v522 = vld [vmem:[%s416 + $0x68] sm:$0xff]
          %v523 = vld [vmem:[%s416 + $0x70] sm:$0xff]
          %v524 = vld [vmem:[%s416 + $0x78] sm:$0xff]
          %v525 = vmul.f32 %v493, %v509
          %v526 = vmul.f32 %v494, %v510
          %v527 = vmul.f32 %v495, %v511
          %v528 = vmul.f32 %v496, %v512
          %v529 = vmul.f32 %v497, %v513
          %v530 = vmul.f32 %v498, %v514
          %v531 = vmul.f32 %v499, %v515
          %v532 = vmul.f32 %v500, %v516
          %v533 = vmul.f32 %v501, %v517
          %v534 = vmul.f32 %v502, %v518
          %v535 = vmul.f32 %v503, %v519
          %v536 = vmul.f32 %v504, %v520
          %v537 = vmul.f32 %v505, %v521
          %v538 = vmul.f32 %v506, %v522
          %v539 = vmul.f32 %v507, %v523
          %v540 = vmul.f32 %v508, %v524
          %v541 = vadd.f32 %v477, %v525
          %v542 = vadd.f32 %v478, %v526
          %v543 = vadd.f32 %v479, %v527
          %v544 = vadd.f32 %v480, %v528
          %v545 = vadd.f32 %v481, %v529
          %v546 = vadd.f32 %v482, %v530
          %v547 = vadd.f32 %v483, %v531
          %v548 = vadd.f32 %v484, %v532
          %v549 = vadd.f32 %v485, %v533
          %v550 = vadd.f32 %v486, %v534
          %v551 = vadd.f32 %v487, %v535
          %v552 = vadd.f32 %v488, %v536
          %v553 = vadd.f32 %v489, %v537
          %v554 = vadd.f32 %v490, %v538
          %v555 = vadd.f32 %v491, %v539
          %v556 = vadd.f32 %v492, %v540
          %v557 = vpack.c.bf16 %v541, %v541
          %v558 = vpack.c.bf16 %v542, %v542
          %v559 = vpack.c.bf16 %v543, %v543
          %v560 = vpack.c.bf16 %v544, %v544
          %v561 = vpack.c.bf16 %v545, %v545
          %v562 = vpack.c.bf16 %v546, %v546
          %v563 = vpack.c.bf16 %v547, %v547
          %v564 = vpack.c.bf16 %v548, %v548
          %v565 = vpack.c.bf16 %v549, %v549
          %v566 = vpack.c.bf16 %v550, %v550
          %v567 = vpack.c.bf16 %v551, %v551
          %v568 = vpack.c.bf16 %v552, %v552
          %v569 = vpack.c.bf16 %v553, %v553
          %v570 = vpack.c.bf16 %v554, %v554
          %v571 = vpack.c.bf16 %v555, %v555
          %v572 = vpack.c.bf16 %v556, %v556
          %573 = vst [vmem:[#allocation2] sm:$0xf] %v557
          %574 = vst [vmem:[#allocation2 + $0x4] sm:$0xf] %v558
          %575 = vst [vmem:[#allocation2 + $0x8] sm:$0xf] %v559
          %576 = vst [vmem:[#allocation2 + $0xc] sm:$0xf] %v560
          %577 = vst [vmem:[#allocation2 + $0x10] sm:$0xf] %v561
          %578 = vst [vmem:[#allocation2 + $0x14] sm:$0xf] %v562
          %579 = vst [vmem:[#allocation2 + $0x18] sm:$0xf] %v563
          %580 = vst [vmem:[#allocation2 + $0x1c] sm:$0xf] %v564
          %581 = vst [vmem:[#allocation2 + $0x20] sm:$0xf] %v565
          %582 = vst [vmem:[#allocation2 + $0x24] sm:$0xf] %v566
          %583 = vst [vmem:[#allocation2 + $0x28] sm:$0xf] %v567
          %584 = vst [vmem:[#allocation2 + $0x2c] sm:$0xf] %v568
          %585 = vst [vmem:[#allocation2 + $0x30] sm:$0xf] %v569
          %586 = vst [vmem:[#allocation2 + $0x34] sm:$0xf] %v570
          %587 = vst [vmem:[#allocation2 + $0x38] sm:$0xf] %v571
          %588 = vst [vmem:[#allocation2 + $0x3c] sm:$0xf] %v572
          %v589 = vld [vmem:[%s465] sm:$0x1]
          %v590 = vld [vmem:[#allocation10] sm:$0x1]
          %v591 = vld [vmem:[%s471] sm:$0x1]
          %v592 = vmul.f32 %v590, %v591
          %v593 = vadd.f32 %v589, %v592
          %594 = vst [vmem:[#allocation3] sm:$0x1] %v593
        $region72: #{tpu_custom_call.1} parent=47 // pred_fallthru
          _
        %v595 = vld [vmem:[%s391] sm:$0xf]
        %v596 = vld [vmem:[%s391 + $0x4] sm:$0xf]
        %v597 = vld [vmem:[#allocation2] sm:$0xf]
        %v598 = vld [vmem:[#allocation2 + $0x4] sm:$0xf]
        %v599 = vld [vmem:[#allocation2 + $0x8] sm:$0xf]
        %v600 = vld [vmem:[#allocation2 + $0xc] sm:$0xf]
        %v601 = vld [vmem:[#allocation2 + $0x10] sm:$0xf]
        %v602 = vld [vmem:[#allocation2 + $0x14] sm:$0xf]
        %v603 = vld [vmem:[#allocation2 + $0x18] sm:$0xf]
        %v604 = vld [vmem:[#allocation2 + $0x1c] sm:$0xf]
        %v605 = vld [vmem:[#allocation2 + $0x20] sm:$0xf]
        %v606 = vld [vmem:[#allocation2 + $0x24] sm:$0xf]
        %v607 = vld [vmem:[#allocation2 + $0x28] sm:$0xf]
        %v608 = vld [vmem:[#allocation2 + $0x2c] sm:$0xf]
        %v609 = vld [vmem:[#allocation2 + $0x30] sm:$0xf]
        %v610 = vld [vmem:[#allocation2 + $0x34] sm:$0xf]
        %v611 = vld [vmem:[#allocation2 + $0x38] sm:$0xf]
        %v612 = vld [vmem:[#allocation2 + $0x3c] sm:$0xf]
        %v613 = vld [vmem:[#allocation3] sm:$0x1]
        %v615 = vperm.slane %v613, 0
        %v619 = vunpack.c.l.b16 %v595
        %v620 = vunpack.c.l.b16 %v596
        %v621 = vpack.c.b16 %v620, %v619
        %v639 = vunpack.c.l.b16 %v597
        %v640 = vunpack.c.l.b16 %v598
        %v641 = vunpack.c.l.b16 %v599
        %v642 = vunpack.c.l.b16 %v600
        %v643 = vunpack.c.l.b16 %v601
        %v644 = vunpack.c.l.b16 %v602
        %v645 = vunpack.c.l.b16 %v603
        %v646 = vunpack.c.l.b16 %v604
        %v647 = vunpack.c.l.b16 %v605
        %v648 = vunpack.c.l.b16 %v606
        %v649 = vunpack.c.l.b16 %v607
        %v650 = vunpack.c.l.b16 %v608
        %v651 = vunpack.c.l.b16 %v609
        %v652 = vunpack.c.l.b16 %v610
        %v653 = vunpack.c.l.b16 %v611
        %v654 = vunpack.c.l.b16 %v612
        %v655 = vpack.c.b16 %v640, %v639
        %v656 = vpack.c.b16 %v642, %v641
        %v657 = vpack.c.b16 %v644, %v643
        %v658 = vpack.c.b16 %v646, %v645
        %v659 = vpack.c.b16 %v648, %v647
        %v660 = vpack.c.b16 %v650, %v649
        %v661 = vpack.c.b16 %v652, %v651
        %v662 = vpack.c.b16 %v654, %v653
        %671 = vmatpush.bf16.msra.mxu0 %v662
        %672 = vmatpush.bf16.msra.mxu0 %v661
        %673 = vmatpush.bf16.msra.mxu0 %v660
        %674 = vmatpush.bf16.msra.mxu0 %v659
        %675 = vmatpush.bf16.msra.mxu0 %v658
        %676 = vmatpush.bf16.msra.mxu0 %v657
        %677 = vmatpush.bf16.msra.mxu0 %v656
        %678 = vmatpush.bf16.msra.mxu0 %v655
        %679 = vmatmul.bf16.gmra.mxu0 %v621
        %v680 = vpop.f32.mrf.mxu0
        %v681 = vadd.f32 %v615, %v680
        %v682 = vpop.f32.mrf.mxu0
        %v683 = vadd.f32 %v615, %v682
        %684 = vdwg.mxu0
        %v685 = vmax.f32 %v681, 0.0
        %v686 = vmax.f32 %v683, 0.0
        %v687 = vpack.c.bf16 %v685, %v685
        %v688 = vpack.c.bf16 %v686, %v686
        %689 = vst [vmem:[%s461] sm:$0xf] %v687
        %690 = vst [vmem:[%s461 + $0x4] sm:$0xf] %v688
        %s691 = sand.u32 %s243, 1
        %s692 = scalar_lea.sflag [#allocation6], %s691
        %s693 = sand.u32 %s243, 1
        %s694 = smul.addr %s693, 8
        %s695 = scalar_lea.vmem [#allocation13], %s694
        // Predicated region
        $region73: #{tpu_custom_call.1} parent=47 // pred_check
          %p696 = pneg %p253
        $region74: #{tpu_custom_call.1} parent=47 // pred_check_branch
          %698 = sbr.rel (%p696) target = $region76
        $region75: #{tpu_custom_call.1} parent=47 // pred_region
          %s699 = smul.u32 2, %s33
          %701 = vsyncadd %s692, 0
          %s702 = sadd.s32 %s32, %s699
          %s703 = smul.addr %s31, 4
          %s704 = sadd.s32 %s702, %s703
          %s705 = smul.addr %s704, 4
          %s706 = scalar_lea.hbm %s7, %s705
          %s707 = sshll.u32 %s695, 4
          %s708 = int_to_ptr.vmem [resolvable:$true] %s707
          %s709 = sshll.u32 %s706, 4
          %s710 = int_to_ptr.hbm [resolvable:$true] %s709
          %715 = dma.vmem_to_hbm [thread:$0]  %s708, 128, %s710, %s692, 64, 64, 4
        $region76: #{tpu_custom_call.1} parent=47 // pred_fallthru
          _
      $region48: #{tpu_custom_call.1} parent=5 // pred_fallthru
        _
      %p716 = scmp.le.s32.totalorder 2, %s21
      // Predicated region
      $region77: #{tpu_custom_call.1} parent=5 // pred_check
        %p717 = pneg %p716
      $region78: #{tpu_custom_call.1} parent=5 // pred_check_branch
        %719 = sbr.rel (%p717) target = $region80
      $region79: #{tpu_custom_call.1} parent=5 // pred_region
        %s720 = ssub.s32 %s21, 2
        // Predicated region
        $region81: #{tpu_custom_call.1} parent=79 // pred_check
          %p721 = pneg %p259
        $region82: #{tpu_custom_call.1} parent=79 // pred_check_branch
          %723 = sbr.rel (%p721) target = $region84
        $region83: #{tpu_custom_call.1} parent=79 // pred_region
          %s724 = sand.u32 %s244, 1
          %s725 = scalar_lea.sflag [#allocation6], %s724
          %s726 = sand.u32 %s244, 1
          %s727 = smul.addr %s726, 8
          %s728 = scalar_lea.vmem [#allocation13], %s727
          %730 = dma.done %s725, 128
        $region84: #{tpu_custom_call.1} parent=79 // pred_fallthru
          _
      $region80: #{tpu_custom_call.1} parent=5 // pred_fallthru
        _
    $region6: #{tpu_custom_call.1} parent=1 // loop_footer
      %s25 = sadd.s32 1, %s21
    $region7: #{tpu_custom_call.1} parent=1 // loop_footer_branch
      %20 = sbr.rel target = $region3
    $region8: #{tpu_custom_call.1} parent=1 // loop_exit
      _
    %731 = vsyncpa [#allocation5], 1
    %s732 = scalar_lea.sflag [#allocation5], 1
    %733 = vsyncpa %s732, 1
    %734 = vsyncpa [#allocation8], 1
    %735 = vsyncpa [#allocation11], 1
    %736 = vsyncpa [#allocation6], 1
    %s737 = scalar_lea.sflag [#allocation6], 1
    %738 = vsyncpa %s737, 1

</llo_original>
